<compile_context>
chip_gen: v5e
topology: v5e:2x2
jax: 0.10.0
libtpu: 0.0.40
codegen_flags: <defaults>
</compile_context>

<pallas_src>
import jax
import jax.numpy as jnp
from jax.experimental import pallas as pl
from jax.experimental.pallas import tpu as pltpu

_LANE = 128
_SUBLANE_BF16 = 16


def _round_up(x: int, m: int) -> int:
    return (x + m - 1) // m * m


def _vmem_budget_bytes() -> int:
    """Per-chip VMEM budget for the pipelined working set (with headroom)."""
    try:
        cap = pltpu.get_tpu_info().vmem_capacity_bytes
    except Exception:
        cap = 64 * 1024 * 1024  # conservative fallback (v7x physical VMEM)
    # ~85% of physical, capped at 100 MiB (v5e/v6e) -> ~54 MiB on v7x.
    return min(int(cap * 0.85), 100 * 1024 * 1024)


def _tile_footprint(tm: int, tk: int, tn: int, out_itemsize: int) -> int:
    return (2 * (tm * tk + tk * tn) * 2   # double-buffered bf16 x / w tiles
            + 2 * tn * 4                  # double-buffered f32 bias tile
            + 2 * tm * tn * out_itemsize  # double-buffered output tile
            + tm * tn * 4)                # f32 accumulator scratch


def _choose_tk(H: int, out_itemsize: int, budget: int) -> int:
    """Reduction-tile size.  Prefer full H (single K step, no padding)."""
    if _tile_footprint(512, H, 2048, out_itemsize) <= budget:
        return H
    tk = min(2048, _round_up(H, _LANE))
    while _tile_footprint(512, tk, 2048, out_itemsize) > budget and tk > 512:
        tk //= 2  # stays a multiple of 128
    return tk


def _choose_tm_tn(M: int, V: int, tk: int, out_itemsize: int, budget: int):
    tm = min(512, _round_up(max(M, 1), _SUBLANE_BF16))
    tn = min(2048, _round_up(V, _LANE))
    while _tile_footprint(tm, tk, tn, out_itemsize) > budget and tn > _LANE:
        tn = max(_LANE, (tn // 2) // _LANE * _LANE)
    while _tile_footprint(tm, tk, tn, out_itemsize) > budget and tm > _SUBLANE_BF16:
        tm = max(_SUBLANE_BF16, _round_up(tm // 2, _SUBLANE_BF16))
    # Keep >=2 blocks on a parallel axis so a second TensorCore (v7x) has work.
    if pl.cdiv(M, tm) < 2 and pl.cdiv(V, tn) < 2 and V >= 2 * _LANE:
        tn = _round_up(pl.cdiv(V, 2), _LANE)
    return tm, tn


def _logit_head_kernel(x_ref, w_ref, b_ref, o_ref, acc_ref):
    # x_ref: (tm, tk) bf16   w_ref: (tk, tn) bf16   b_ref: (1, tn) f32
    # o_ref: (tm, tn) out    acc_ref: (tm, tn) f32 scratch
    k = pl.program_id(2)
    prod = jnp.dot(x_ref[...], w_ref[...], preferred_element_type=jnp.float32)

    @pl.when(k == 0)
    def _():
        # Bias folded into the init: no separate zero-store + bias-add pass.
        acc_ref[...] = b_ref[...] + prod

    @pl.when(k > 0)
    def _():
        acc_ref[...] += prod

    @pl.when(k == pl.num_programs(2) - 1)
    def _():
        o_ref[...] = acc_ref[...].astype(o_ref.dtype)


def prepare_logit_head_params(w, b, *, out_dtype=jnp.bfloat16):
    """One-time (cold-path) weight prep: bf16 cast + optional H padding.

    w: [H, V] f32, b: [V] f32.  Returns a params dict for logit_head_pallas.
    """
    H, V = w.shape
    out_itemsize = jnp.dtype(out_dtype).itemsize
    budget = _vmem_budget_bytes()
    tk = _choose_tk(H, out_itemsize, budget)
    Hp = H if tk == H else _round_up(H, tk)

    wb = w.astype(jnp.bfloat16)
    if Hp != H:
        # Zero padding only along the reduction axis (required for correctness).
        wb = jnp.pad(wb, ((0, Hp - H), (0, 0)))
    b2 = b.astype(jnp.float32).reshape(1, V)
    return {"w": wb, "b": b2, "tk": tk, "h": H, "out_dtype": out_dtype,
            "vmem_budget": budget}


def logit_head_pallas(x2d, params):
    """Hot path: logits[M, V] = x2d[M, H] @ W + b on the MXU."""
    wb, b2, tk = params["w"], params["b"], params["tk"]
    out_dtype = params["out_dtype"]
    budget = params["vmem_budget"]
    M, H = x2d.shape
    Hp, V = wb.shape
    assert H == params["h"]
    out_itemsize = jnp.dtype(out_dtype).itemsize

    xb = x2d.astype(jnp.bfloat16)
    if Hp != H:
        xb = jnp.pad(xb, ((0, 0), (0, Hp - H)))  # zero-pad reduction axis only

    tm, tn = _choose_tm_tn(M, V, tk, out_itemsize, budget)
    grid = (pl.cdiv(M, tm), pl.cdiv(V, tn), Hp // tk)

    cost = pl.CostEstimate(
        flops=2 * M * Hp * V,
        transcendentals=0,
        bytes_accessed=(M * Hp * 2 + Hp * V * 2 + M * V * out_itemsize + V * 4),
    )

    return pl.pallas_call(
        _logit_head_kernel,
        out_shape=jax.ShapeDtypeStruct((M, V), out_dtype),
        grid_spec=pltpu.PrefetchScalarGridSpec(
            num_scalar_prefetch=0,
            grid=grid,
            in_specs=[
                pl.BlockSpec((tm, tk), lambda i, j, k: (i, k)),
                pl.BlockSpec((tk, tn), lambda i, j, k: (k, j)),
                pl.BlockSpec((1, tn), lambda i, j, k: (0, j)),
            ],
            out_specs=pl.BlockSpec((tm, tn), lambda i, j, k: (i, j)),
            scratch_shapes=[pltpu.VMEM((tm, tn), jnp.float32)],
        ),
        compiler_params=pltpu.CompilerParams(
            dimension_semantics=("parallel", "parallel", "arbitrary"),
            vmem_limit_bytes=budget,
        ),
        cost_estimate=cost,
    )(xb, wb, b2)


def logit_only_model_wrapper_forward(x, params):
    """Equivalent of LogitOnlyModelWrapper(Linear(H, V)).forward(x).

    x: [B, S, H] -> {'logits': [B, S, V]} (dtype = params['out_dtype']).
    """
    B, S, H = x.shape
    V = params["b"].shape[-1]
    logits2d = logit_head_pallas(x.reshape(B * S, H), params)
    return {"logits": logits2d.reshape(B, S, V)}


if __name__ == "__main__":
    B, S, H, V = 2, 8, 32, 128

    key = jax.random.PRNGKey(0)
    kx, kw, kb = jax.random.split(key, 3)

    # Deterministic synthetic parameters (nn.Linear-style init scale).
    x = jax.random.normal(kx, (B, S, H), dtype=jnp.float32)
    w = jax.random.uniform(kw, (H, V), dtype=jnp.float32,
                           minval=-1.0 / jnp.sqrt(H), maxval=1.0 / jnp.sqrt(H))
    b = jax.random.uniform(kb, (V,), dtype=jnp.float32,
                           minval=-1.0 / jnp.sqrt(H), maxval=1.0 / jnp.sqrt(H))

    # Cold path: weight prep happens once, outside the forward.
    params = prepare_logit_head_params(w, b, out_dtype=jnp.bfloat16)

    out = logit_only_model_wrapper_forward(x, params)
    logits = jax.block_until_ready(out["logits"])
    assert logits.shape == (B, S, V)
    assert logits.dtype == jnp.bfloat16

    logits_f32 = logits.astype(jnp.float32)

    # Reference with matching bf16 operand precision (f32 accumulation).
    x2d = x.reshape(B * S, H)
    ref_bf16 = (jnp.dot(x2d.astype(jnp.bfloat16), w.astype(jnp.bfloat16),
                        preferred_element_type=jnp.float32) + b).reshape(B, S, V)
    assert jnp.allclose(logits_f32, ref_bf16, atol=2e-2, rtol=2e-2)

    # Looser sanity check against the full-f32 reference.
    ref_f32 = jnp.einsum("bsh,hv->bsv", x, w) + b
    assert jnp.allclose(logits_f32, ref_f32, atol=5e-2, rtol=5e-2)

    print("KERNEL_OK")
</pallas_src>

<mosaic_0001>
module attributes {stable_mosaic.version = 11 : i64} {
  func.func @_logit_head_kernel(%arg0: i32, %arg1: i32, %arg2: i32, %arg3: memref<16x32xbf16, #tpu.memory_space<vmem>>, %arg4: memref<32x128xbf16, #tpu.memory_space<vmem>>, %arg5: memref<1x128xf32, #tpu.memory_space<vmem>>, %arg6: memref<16x128xbf16, #tpu.memory_space<vmem>>, %arg7: memref<16x128xf32, #tpu.memory_space<vmem>>) attributes {dimension_semantics = [#tpu.dimension_semantics<parallel>, #tpu.dimension_semantics<parallel>, #tpu.dimension_semantics<arbitrary>], iteration_bounds = array<i64: 1, 1, 1>, scalar_prefetch = 0 : i64, scratch_operands = 1 : i64, tpu.core_type = #tpu.core_type<tc>, window_params = [{transform_indices = @transform_0, window_bounds = array<i64: 16, 32>}, {transform_indices = @transform_1, window_bounds = array<i64: 32, 128>}, {transform_indices = @transform_2, window_bounds = array<i64: 1, 128>}, {transform_indices = @transform_3, window_bounds = array<i64: 16, 128>}]} {
    %c0 = arith.constant 0 : index
    %c0_0 = arith.constant 0 : index
    %0 = vector.load %arg3[%c0, %c0_0] : memref<16x32xbf16, #tpu.memory_space<vmem>>, vector<16x32xbf16>
    %c0_1 = arith.constant 0 : index
    %c0_2 = arith.constant 0 : index
    %1 = vector.load %arg4[%c0_1, %c0_2] : memref<32x128xbf16, #tpu.memory_space<vmem>>, vector<32x128xbf16>
    %cst = arith.constant dense<0.000000e+00> : vector<16x128xf32>
    %2 = tpu.matmul %0, %1, %cst {dimension_numbers = #tpu.dot_dimension_numbers<[1], [0], [0], [1], [0, 0, 1, 1], [], []>} : vector<16x32xbf16>, vector<32x128xbf16>, vector<16x128xf32> -> vector<16x128xf32>
    %c0_i32 = arith.constant 0 : i32
    %3 = arith.cmpi eq, %arg2, %c0_i32 : i32
    %4 = arith.extui %3 : i1 to i32
    %c0_i32_3 = arith.constant 0 : i32
    %5 = arith.cmpi ne, %4, %c0_i32_3 : i32
    scf.if %5 {
      %c0_8 = arith.constant 0 : index
      %c0_9 = arith.constant 0 : index
      %12 = vector.load %arg5[%c0_8, %c0_9] : memref<1x128xf32, #tpu.memory_space<vmem>>, vector<1x128xf32>
      %13 = vector.broadcast %12 : vector<1x128xf32> to vector<16x128xf32>
      %14 = arith.addf %13, %2 : vector<16x128xf32>
      %c0_10 = arith.constant 0 : index
      %c0_11 = arith.constant 0 : index
      %15 = vector.load %arg7[%c0_10, %c0_11] : memref<16x128xf32, #tpu.memory_space<vmem>>, vector<16x128xf32>
      tpu.vector_store %arg7[%c0_10, %c0_11], %14 {strides = array<i32>} : memref<16x128xf32, #tpu.memory_space<vmem>>, vector<16x128xf32>,
    } else {
    }
    %c0_i32_4 = arith.constant 0 : i32
    %6 = arith.cmpi sgt, %arg2, %c0_i32_4 : i32
    %7 = arith.extui %6 : i1 to i32
    %c0_i32_5 = arith.constant 0 : i32
    %8 = arith.cmpi ne, %7, %c0_i32_5 : i32
    scf.if %8 {
      %c0_8 = arith.constant 0 : index
      %c0_9 = arith.constant 0 : index
      %12 = vector.load %arg7[%c0_8, %c0_9] : memref<16x128xf32, #tpu.memory_space<vmem>>, vector<16x128xf32>
      %13 = arith.addf %12, %2 : vector<16x128xf32>
      %c0_10 = arith.constant 0 : index
      %c0_11 = arith.constant 0 : index
      %14 = vector.load %arg7[%c0_10, %c0_11] : memref<16x128xf32, #tpu.memory_space<vmem>>, vector<16x128xf32>
      tpu.vector_store %arg7[%c0_10, %c0_11], %13 {strides = array<i32>} : memref<16x128xf32, #tpu.memory_space<vmem>>, vector<16x128xf32>,
    } else {
    }
    %c0_i32_6 = arith.constant 0 : i32
    %9 = arith.cmpi eq, %arg2, %c0_i32_6 : i32
    %10 = arith.extui %9 : i1 to i32
    %c0_i32_7 = arith.constant 0 : i32
    %11 = arith.cmpi ne, %10, %c0_i32_7 : i32
    scf.if %11 {
      %c0_8 = arith.constant 0 : index
      %c0_9 = arith.constant 0 : index
      %12 = vector.load %arg7[%c0_8, %c0_9] : memref<16x128xf32, #tpu.memory_space<vmem>>, vector<16x128xf32>
      %13 = arith.truncf %12 : vector<16x128xf32> to vector<16x128xbf16>
      %c0_10 = arith.constant 0 : index
      %c0_11 = arith.constant 0 : index
      %14 = vector.load %arg6[%c0_10, %c0_11] : memref<16x128xbf16, #tpu.memory_space<vmem>>, vector<16x128xbf16>
      tpu.vector_store %arg6[%c0_10, %c0_11], %13 {strides = array<i32>} : memref<16x128xbf16, #tpu.memory_space<vmem>>, vector<16x128xbf16>,
    } else {
    }
    return
  }
  func.func @transform_0(%arg0: i32, %arg1: i32, %arg2: i32) -> (i32, i32) {
    %c0_i32 = arith.constant 0 : i32
    return %arg0, %arg2 : i32, i32
  }
  func.func @transform_1(%arg0: i32, %arg1: i32, %arg2: i32) -> (i32, i32) {
    %c0_i32 = arith.constant 0 : i32
    return %arg2, %arg1 : i32, i32
  }
  func.func @transform_2(%arg0: i32, %arg1: i32, %arg2: i32) -> (i32, i32) {
    %c0_i32 = arith.constant 0 : i32
    %c0_i32_0 = arith.constant 0 : i32
    return %c0_i32, %arg1 : i32, i32
  }
  func.func @transform_3(%arg0: i32, %arg1: i32, %arg2: i32) -> (i32, i32) {
    %c0_i32 = arith.constant 0 : i32
    return %arg0, %arg1 : i32, i32
  }
}

</mosaic_0001>

<llo_original>
// kernel: tpu_custom_call.1
$region0: #{tpu_custom_call.1}
  #allocation0 [shape = 'u32[]', space=smem, size = 0x4, offset = 0x4, fixed_abs, tag = 'smem constant byte address 0x4 - core index']
  #allocation1 [shape = 'u32[72,128]{1,0:T(1,128)}', space=vmem, size = 0x9000, scoped, tag = 'internal scratch']
  #allocation2 [shape = 'f32[16,128]{1,0:T(8,128)}', space=vmem, size = 0x2000, scoped, tag = 'scratch operand']
  %s0 = inlined_call_operand.hbm [shape: bf16[16,32], index: 0, kind: input, shape index: {}]
  %s1 = inlined_call_operand.hbm [shape: bf16[32,128], index: 1, kind: input, shape index: {}]
  %s2 = inlined_call_operand.vmem [shape: f32[1,128], index: 2, kind: input, shape index: {}]
  %s3 = inlined_call_operand.hbm [shape: bf16[16,128], index: 3, kind: output, shape index: {}]
  %s4 = sld [smem:[#allocation0]]
  $region42: #{tpu_custom_call.1} parent=0
    _
  %s6 = ssub.s32 1, %s4
  %s7 = scalar_select 0, %s6, %s4
  $region1: #{tpu_custom_call.1} parent=0
    #allocation3 [shape = 'u8[4096]{0}', space=vmem, size = 0x1000, scoped, tag = 'input window, operand 0, single buffered']
    #allocation4 [shape = 's32[1]{0}', space=sflag, size = 0x4, scoped, tag = 'scoped memory for tpu_custom_call.1']
    #allocation5 [shape = 's32[1]{0}', space=sflag, size = 0x4, scoped, tag = 'scoped memory for tpu_custom_call.1']
    #allocation6 [shape = 'u8[8192]{0}', space=vmem, size = 0x2000, scoped, tag = 'input window, operand 1, single buffered']
    #allocation7 [shape = 's32[1]{0}', space=sflag, size = 0x4, scoped, tag = 'scoped memory for tpu_custom_call.1']
    #allocation8 [shape = 'u8[4096]{0}', space=vmem, size = 0x1000, scoped, tag = 'output window, operand 0, single buffered']
    %8 = vsyncpa [#allocation4], 0
    %9 = vsyncpa [#allocation7], 0
    %10 = vsyncpa [#allocation5], 0
    // Predicated region
    $region2: #{tpu_custom_call.1} parent=1 // pred_check
      _
    $region3: #{tpu_custom_call.1} parent=1 // pred_check_branch
      %12 = sbr.rel (0) target = $region5
    $region4: #{tpu_custom_call.1} parent=1 // pred_region
      %14 = vsyncadd [#allocation4], 0
      %s15 = sshll.u32 %s0, 4
      %s16 = int_to_ptr.hbm [resolvable:$true] %s15
      %s17 = sshll.u32 [#allocation3], 4
      %s18 = int_to_ptr.vmem [resolvable:$true] %s17
      %23 = dma.hbm_to_vmem [thread:$0]  %s16, 128, %s18, [#allocation4], 64, 64, 4
    $region5: #{tpu_custom_call.1} parent=1 // pred_fallthru
      _
    // Predicated region
    $region6: #{tpu_custom_call.1} parent=1 // pred_check
      _
    $region7: #{tpu_custom_call.1} parent=1 // pred_check_branch
      %25 = sbr.rel (0) target = $region9
    $region8: #{tpu_custom_call.1} parent=1 // pred_region
      %27 = vsyncadd [#allocation7], 0
      %s28 = sshll.u32 %s1, 4
      %s29 = int_to_ptr.hbm [resolvable:$true] %s28
      %s30 = sshll.u32 [#allocation6], 4
      %s31 = int_to_ptr.vmem [resolvable:$true] %s30
      %36 = dma.hbm_to_vmem [thread:$0]  %s29, 256, %s31, [#allocation7], 64, 64, 4
    $region9: #{tpu_custom_call.1} parent=1 // pred_fallthru
      _
    // Predicated region
    $region10: #{tpu_custom_call.1} parent=1 // pred_check
      _
    $region11: #{tpu_custom_call.1} parent=1 // pred_check_branch
      %38 = sbr.rel (0) target = $region13
    $region12: #{tpu_custom_call.1} parent=1 // pred_region
      _
    $region13: #{tpu_custom_call.1} parent=1 // pred_fallthru
      _
    // Predicated region
    $region14: #{tpu_custom_call.1} parent=1 // pred_check
      _
    $region15: #{tpu_custom_call.1} parent=1 // pred_check_branch
      %40 = sbr.rel (0) target = $region17
    $region16: #{tpu_custom_call.1} parent=1 // pred_region
      %42 = dma.done [#allocation4], 128
    $region17: #{tpu_custom_call.1} parent=1 // pred_fallthru
      _
    // Predicated region
    $region18: #{tpu_custom_call.1} parent=1 // pred_check
      _
    $region19: #{tpu_custom_call.1} parent=1 // pred_check_branch
      %44 = sbr.rel (0) target = $region21
    $region20: #{tpu_custom_call.1} parent=1 // pred_region
      %46 = dma.done [#allocation7], 256
    $region21: #{tpu_custom_call.1} parent=1 // pred_fallthru
      _
    %v48 = vld [vmem:[#allocation3] sm:$0xf]
    %v49 = vld [vmem:[#allocation3 + $0x4] sm:$0xf]
    %v50 = vld [vmem:[#allocation6] sm:$0xf]
    %v51 = vld [vmem:[#allocation6 + $0x4] sm:$0xf]
    %v52 = vld [vmem:[#allocation6 + $0x8] sm:$0xf]
    %v53 = vld [vmem:[#allocation6 + $0xc] sm:$0xf]
    %v56 = vunpack.c.l.b16 %v48
    %v57 = vunpack.c.l.b16 %v49
    %v58 = vpack.c.b16 %v57, %v56
    %v63 = vunpack.c.l.b16 %v50
    %v64 = vunpack.c.l.b16 %v51
    %v65 = vunpack.c.l.b16 %v52
    %v66 = vunpack.c.l.b16 %v53
    %v67 = vpack.c.b16 %v64, %v63
    %v68 = vpack.c.b16 %v66, %v65
    %vm71 = vcmask 261120
    %v73 = vsel %vm71, %v58, 0
    %75 = vmatpush.bf16.msra.mxu0 0
    %76 = vmatpush.bf16.msra.mxu0 0
    %77 = vmatpush.bf16.msra.mxu0 0
    %78 = vmatpush.bf16.msra.mxu0 0
    %79 = vmatpush.bf16.msra.mxu0 0
    %80 = vmatpush.bf16.msra.mxu0 0
    %81 = vmatpush.bf16.msra.mxu0 %v68
    %82 = vmatpush.bf16.msra.mxu0 %v67
    %83 = vmatmul.bf16.gmra.mxu0 %v73
    %v84 = vpop.f32.mrf.mxu0
    %v85 = vadd.f32 0.0, %v84
    %v86 = vpop.f32.mrf.mxu0
    %v87 = vadd.f32 0.0, %v86
    %88 = vdwg.mxu0
    %p89 = scmp.eq.s32.totalorder 0, 0
    // Predicated region
    $region22: #{tpu_custom_call.1} parent=1 // pred_check
      %p90 = pneg %p89
    $region23: #{tpu_custom_call.1} parent=1 // pred_check_branch
      %92 = sbr.rel (%p90) target = $region25
    $region24: #{tpu_custom_call.1} parent=1 // pred_region
      %v93 = vld [vmem:[%s2] sm:$0x1]
      %v95 = vperm.slane %v93, 0
      %v97 = vadd.f32 %v95, %v85
      %v98 = vadd.f32 %v95, %v87
      %99 = vst [vmem:[#allocation2] sm:$0xff] %v97
      %100 = vst [vmem:[#allocation2 + $0x8] sm:$0xff] %v98
    $region25: #{tpu_custom_call.1} parent=1 // pred_fallthru
      _
    %p101 = scmp.gt.s32.totalorder 0, 0
    // Predicated region
    $region26: #{tpu_custom_call.1} parent=1 // pred_check
      %p102 = pneg %p101
    $region27: #{tpu_custom_call.1} parent=1 // pred_check_branch
      %104 = sbr.rel (%p102) target = $region29
    $region28: #{tpu_custom_call.1} parent=1 // pred_region
      %v105 = vld [vmem:[#allocation2] sm:$0xff]
      %v106 = vld [vmem:[#allocation2 + $0x8] sm:$0xff]
      %v107 = vadd.f32 %v105, %v85
      %v108 = vadd.f32 %v106, %v87
      %109 = vst [vmem:[#allocation2] sm:$0xff] %v107
      %110 = vst [vmem:[#allocation2 + $0x8] sm:$0xff] %v108
    $region29: #{tpu_custom_call.1} parent=1 // pred_fallthru
      _
    // Predicated region
    $region30: #{tpu_custom_call.1} parent=1 // pred_check
      %p111 = pneg %p89
    $region31: #{tpu_custom_call.1} parent=1 // pred_check_branch
      %113 = sbr.rel (%p111) target = $region33
    $region32: #{tpu_custom_call.1} parent=1 // pred_region
      %v114 = vld [vmem:[#allocation2] sm:$0xff]
      %v115 = vld [vmem:[#allocation2 + $0x8] sm:$0xff]
      %v116 = vpack.c.bf16 %v114, %v114
      %v117 = vpack.c.bf16 %v115, %v115
      %118 = vst [vmem:[#allocation8] sm:$0xf] %v116
      %119 = vst [vmem:[#allocation8 + $0x4] sm:$0xf] %v117
    $region33: #{tpu_custom_call.1} parent=1 // pred_fallthru
      _
    // Predicated region
    $region34: #{tpu_custom_call.1} parent=1 // pred_check
      _
    $region35: #{tpu_custom_call.1} parent=1 // pred_check_branch
      %121 = sbr.rel (0) target = $region37
    $region36: #{tpu_custom_call.1} parent=1 // pred_region
      %123 = vsyncadd [#allocation5], 0
      %s124 = sshll.u32 [#allocation8], 4
      %s125 = int_to_ptr.vmem [resolvable:$true] %s124
      %s126 = sshll.u32 %s3, 4
      %s127 = int_to_ptr.hbm [resolvable:$true] %s126
      %132 = dma.vmem_to_hbm [thread:$0]  %s125, 128, %s127, [#allocation5], 64, 64, 4
    $region37: #{tpu_custom_call.1} parent=1 // pred_fallthru
      _
    // Predicated region
    $region38: #{tpu_custom_call.1} parent=1 // pred_check
      _
    $region39: #{tpu_custom_call.1} parent=1 // pred_check_branch
      %134 = sbr.rel (0) target = $region41
    $region40: #{tpu_custom_call.1} parent=1 // pred_region
      %136 = dma.done [#allocation5], 128
    $region41: #{tpu_custom_call.1} parent=1 // pred_fallthru
      _
    %137 = vsyncpa [#allocation4], 1
    %138 = vsyncpa [#allocation7], 1
    %139 = vsyncpa [#allocation5], 1

</llo_original>
